<compile_context>
chip_gen: v7x
topology: tpu7x:2x2x1
jax: 0.10.0
libtpu: 0.0.40
codegen_flags: <defaults>
</compile_context>

<pallas_src>
import functools

import jax
import jax.numpy as jnp
from jax.experimental import pallas as pl
from jax.experimental.pallas import tpu as pltpu


def _sigmoid(x):
    # sigmoid(x) = 0.5*tanh(0.5*x) + 0.5: one EUP tanh + a VPU FMA instead of
    # exp + add + divide. The EUP slot is the scarce one once the weights are
    # VMEM-resident and the kernel becomes compute-bound.
    return 0.5 * jnp.tanh(0.5 * x) + 0.5


# -----------------------------------------------------------------------------
# One-time parameter packing (hoisted out of the per-step path).
# -----------------------------------------------------------------------------
def prepare_lstm_params(wx, bx, wh, bh, *, tile_n=None,
                        compute_dtype=jnp.bfloat16):
    """Packs nn.Linear params for the kernels.

    wx: [4H, D], wh: [4H, H], bx/bh: [4H] (torch nn.Linear layout; gate order
    along 4H is [input, forget, cell, output], matching .chunk(4, 1)).

    Returns Wx: [D, 4H], Wh: [H, 4H] (compute_dtype) and b: [1, 4H] (f32) with
    the 4H columns permuted into gate-interleaved hidden tiles of width tile_n:
    column block j holds [i|f|g|o] for hidden units j*tile_n:(j+1)*tile_n, so an
    N-tiled kernel only ever touches a [K, 4*tile_n] weight slab.
    tile_n=None keeps the plain [i|f|g|o]-over-full-H order (== tile_n=H).
    """
    four_h, _ = wx.shape
    h = four_h // 4
    tn = h if tile_n is None else tile_n
    assert h % tn == 0, "tile_n must divide hidden_dim"
    nh = h // tn

    def pack_cols(w):  # w: [K, 4H], columns ordered (gate, hidden_unit)
        k = w.shape[0]
        return (w.reshape(k, 4, nh, tn)
                 .transpose(0, 2, 1, 3)        # -> (K, tile, gate, unit)
                 .reshape(k, 4 * h))

    w_x = pack_cols(wx.T).astype(compute_dtype)
    w_h = pack_cols(wh.T).astype(compute_dtype)
    b = pack_cols((bx + bh).astype(jnp.float32).reshape(1, -1))
    return w_x, w_h, b


# -----------------------------------------------------------------------------
# Single LSTM step (mirrors LSTMcell.forward exactly).
# -----------------------------------------------------------------------------
def lstm_cell_kernel(x_ref, h_ref, cx_ref, wx_ref, wh_ref, b_ref,
                     hy_ref, cy_ref):
    tn = hy_ref.shape[1]

    # Two fused MXU dots into one f32 accumulator (no concat operand).
    gates = (jnp.dot(x_ref[...], wx_ref[...],
                     preferred_element_type=jnp.float32)
             + jnp.dot(h_ref[...], wh_ref[...],
                       preferred_element_type=jnp.float32)
             + b_ref[...])                     # [tb, 4*tn], gate-interleaved

    i_t = _sigmoid(gates[:, 0 * tn:1 * tn])
    f_t = _sigmoid(gates[:, 1 * tn:2 * tn])
    g_t = jnp.tanh(gates[:, 2 * tn:3 * tn])
    o_t = _sigmoid(gates[:, 3 * tn:4 * tn])

    # Module quirk: cx == hidden. cx_ref is the exact-f32 (tb, tn) view of the
    # SAME hidden array (not a second full copy in another dtype).
    cy = cx_ref[...] * f_t + i_t * g_t
    hy = o_t * jnp.tanh(cy)

    hy_ref[...] = hy.astype(hy_ref.dtype)
    cy_ref[...] = cy                            # carry stays float32


@functools.partial(jax.jit, static_argnames=("tile_n", "tile_b"))
def lstm_cell(x, hidden, w_x, w_h, b, *, tile_n=None, tile_b=256):
    """Mirrors LSTMcell.forward(input, hidden): `hidden` is used as BOTH hx and
    cx (the PyTorch code does `hidden = (hidden, hidden)`).
    Returns (hy, cy); cy is float32.
    w_x/w_h/b must come from prepare_lstm_params(..., tile_n=tile_n)."""
    B, D = x.shape
    if hidden is None:
        hidden = jnp.zeros((B, w_h.shape[0]), dtype=x.dtype)
    H = hidden.shape[1]
    tn = H if tile_n is None else tile_n

    assert w_x.shape == (D, 4 * H) and w_h.shape == (H, 4 * H)
    assert b.shape == (1, 4 * H)
    assert H % 128 == 0 and tn % 128 == 0 and H % tn == 0, (
        "hidden_dim and tile_n must be multiples of 128 for lane-dense gate "
        "slices and unmasked vector stores")

    nh = H // tn
    tb = min(B, tile_b)
    if tb < B:
        tb = max(8, (tb // 8) * 8)              # keep batch tiles sublane-aligned
    nb = pl.cdiv(B, tb)

    x_bf = x.astype(w_x.dtype)                  # bf16 MXU operand
    h_bf = hidden.astype(w_x.dtype)             # bf16 MXU operand (full H)
    cx_f32 = hidden.astype(jnp.float32)         # exact f32 cell state (per-tile view)

    # Explicit VMEM budget: 2x (double-buffered) per streamed block + the f32
    # gates intermediate + headroom. (The weight slab is bounded by the
    # N-tiling; true 1x single-buffered weight residency is demonstrated in
    # lstm_sequence below, where it matters most.)
    w_bytes = (D + H) * 4 * tn * jnp.dtype(w_x.dtype).itemsize
    act_bytes = (tb * D * 2 + tb * H * 2 + tb * tn * 4 + 4 * tn * 4
                 + tb * tn * (jnp.dtype(x.dtype).itemsize + 4))
    vmem_limit = int(min(max(2 * (w_bytes + act_bytes) + tb * 4 * tn * 4
                             + (4 << 20), 16 << 20), 64 << 20))

    hy, cy = pl.pallas_call(
        lstm_cell_kernel,
        out_shape=(
            jax.ShapeDtypeStruct((B, H), x.dtype),        # hy
            jax.ShapeDtypeStruct((B, H), jnp.float32),    # cy (f32 carry)
        ),
        grid_spec=pltpu.PrefetchScalarGridSpec(
            num_scalar_prefetch=0,
            # Hidden tiles OUTER so the weight slab stays resident across all
            # batch tiles; both axes are independent -> "parallel".
            grid=(nh, nb),
            in_specs=[
                pl.BlockSpec((tb, D), lambda j, i: (i, 0)),        # x (bf16)
                pl.BlockSpec((tb, H), lambda j, i: (i, 0)),        # h (bf16)
                pl.BlockSpec((tb, tn), lambda j, i: (i, j)),       # cx f32 tile
                pl.BlockSpec((D, 4 * tn), lambda j, i: (0, j)),    # Wx slab
                pl.BlockSpec((H, 4 * tn), lambda j, i: (0, j)),    # Wh slab
                pl.BlockSpec((1, 4 * tn), lambda j, i: (0, j)),    # bias slab
            ],
            out_specs=(
                pl.BlockSpec((tb, tn), lambda j, i: (i, j)),
                pl.BlockSpec((tb, tn), lambda j, i: (i, j)),
            ),
        ),
        compiler_params=pltpu.CompilerParams(
            dimension_semantics=("parallel", "parallel"),
            vmem_limit_bytes=vmem_limit,
        ),
    )(x_bf, h_bf, cx_f32, w_x, w_h, b)
    return hy, cy


# -----------------------------------------------------------------------------
# Fused sequence: T LSTMcell.forward steps inside ONE pallas_call.
# -----------------------------------------------------------------------------
def lstm_seq_kernel(x_ref, h0_ref, wx_hbm, wh_hbm, b_ref, hy_ref, cy_ref,
                    h_scr, wx_vmem, wh_vmem, w_sem):
    t = pl.program_id(1)

    @pl.when(t == 0)
    def _():
        # Single-buffered weight residency: DMA the packed weights HBM->VMEM
        # once per (core, batch tile); they stay resident for all T steps.
        cp_x = pltpu.make_async_copy(wx_hbm, wx_vmem, w_sem.at[0])
        cp_h = pltpu.make_async_copy(wh_hbm, wh_vmem, w_sem.at[1])
        cp_x.start()
        cp_h.start()
        cp_x.wait()
        cp_h.wait()
        h_scr[...] = h0_ref[...]                # f32 hidden carry

    H = h_scr.shape[1]
    h_f32 = h_scr[...]
    gates = (jnp.dot(x_ref[0], wx_vmem[...],
                     preferred_element_type=jnp.float32)
             + jnp.dot(h_f32.astype(wh_vmem.dtype), wh_vmem[...],
                       preferred_element_type=jnp.float32)
             + b_ref[...])                      # [tb, 4H], plain [i|f|g|o]

    i_t = _sigmoid(gates[:, 0 * H:1 * H])
    f_t = _sigmoid(gates[:, 1 * H:2 * H])
    g_t = jnp.tanh(gates[:, 2 * H:3 * H])
    o_t = _sigmoid(gates[:, 3 * H:4 * H])

    cy = h_f32 * f_t + i_t * g_t                # module quirk: cx == hidden_t
    hy = o_t * jnp.tanh(cy)

    hy_ref[0] = hy.astype(hy_ref.dtype)
    cy_ref[0] = cy
    h_scr[...] = hy                             # next step's hidden (stays f32)


@functools.partial(jax.jit, static_argnames=("tile_b",))
def lstm_sequence(xs, h0, w_x, w_h, b, *, tile_b=256):
    """Applies LSTMcell.forward T times inside one pallas_call.
    Recurrence follows the module: hidden_{t+1} = hy_t (and cx_t = hidden_t).
    Expects the plain (tile_n=None) packing from prepare_lstm_params.
    Returns (hy_seq [T,B,H], cy_seq [T,B,H] float32)."""
    T, B, D = xs.shape
    H = h0.shape[1]
    assert w_x.shape == (D, 4 * H) and w_h.shape == (H, 4 * H)
    assert b.shape == (1, 4 * H)
    assert H % 128 == 0, "hidden_dim must be a multiple of 128"

    tb = min(B, tile_b)
    if tb < B:
        tb = max(8, (tb // 8) * 8)
    nb = pl.cdiv(B, tb)

    xs_bf = xs.astype(w_x.dtype)
    h0_f32 = h0.astype(jnp.float32)

    w_bytes = (D + H) * 4 * H * jnp.dtype(w_x.dtype).itemsize  # single-buffered
    act_bytes = 2 * (tb * D * 2 + tb * H * 4 + 4 * H * 4
                     + tb * H * (jnp.dtype(xs.dtype).itemsize + 4))
    vmem_limit = int(min(max(w_bytes + act_bytes + tb * 4 * H * 4 + tb * H * 4
                             + (4 << 20), 16 << 20), 64 << 20))

    hy_seq, cy_seq = pl.pallas_call(
        lstm_seq_kernel,
        out_shape=(
            jax.ShapeDtypeStruct((T, B, H), xs.dtype),
            jax.ShapeDtypeStruct((T, B, H), jnp.float32),
        ),
        grid_spec=pltpu.PrefetchScalarGridSpec(
            num_scalar_prefetch=0,
            grid=(nb, T),                        # batch parallel, time innermost
            in_specs=[
                pl.BlockSpec((1, tb, D), lambda i, t: (t, i, 0)),  # x[t]
                pl.BlockSpec((tb, H), lambda i, t: (i, 0)),        # h0 (f32)
                pl.BlockSpec(memory_space=pl.ANY),                 # Wx (HBM)
                pl.BlockSpec(memory_space=pl.ANY),                 # Wh (HBM)
                pl.BlockSpec((1, 4 * H), lambda i, t: (0, 0)),     # bias
            ],
            out_specs=(
                pl.BlockSpec((1, tb, H), lambda i, t: (t, i, 0)),
                pl.BlockSpec((1, tb, H), lambda i, t: (t, i, 0)),
            ),
            scratch_shapes=[
                pltpu.VMEM((tb, H), jnp.float32),     # f32 hidden carry
                pltpu.VMEM((D, 4 * H), w_x.dtype),    # resident Wx (1x buffer)
                pltpu.VMEM((H, 4 * H), w_h.dtype),    # resident Wh (1x buffer)
                pltpu.SemaphoreType.DMA((2,)),
            ],
        ),
        compiler_params=pltpu.CompilerParams(
            dimension_semantics=("parallel", "arbitrary"),
            vmem_limit_bytes=vmem_limit,
        ),
    )(xs_bf, h0_f32, w_x, w_h, b)
    return hy_seq, cy_seq


# -----------------------------------------------------------------------------
# Pure-JAX references (same bf16 matmul inputs, f32 gating / cell state).
# -----------------------------------------------------------------------------
def _reference_step(x, hidden, wx, bx, wh, bh):
    xb = x.astype(jnp.bfloat16)
    hb = hidden.astype(jnp.bfloat16)
    gates = (jnp.dot(xb, wx.T.astype(jnp.bfloat16),
                     preferred_element_type=jnp.float32)
             + jnp.dot(hb, wh.T.astype(jnp.bfloat16),
                       preferred_element_type=jnp.float32)
             + (bx + bh))
    H = hidden.shape[1]
    i_t = jax.nn.sigmoid(gates[:, 0 * H:1 * H])
    f_t = jax.nn.sigmoid(gates[:, 1 * H:2 * H])
    g_t = jnp.tanh(gates[:, 2 * H:3 * H])
    o_t = jax.nn.sigmoid(gates[:, 3 * H:4 * H])
    cy = hidden.astype(jnp.float32) * f_t + i_t * g_t
    hy = o_t * jnp.tanh(cy)
    return hy.astype(x.dtype), cy


def _reference_sequence(xs, h0, wx, bx, wh, bh):
    h = h0
    hys, cys = [], []
    for t in range(xs.shape[0]):
        hy, cy = _reference_step(xs[t], h, wx, bx, wh, bh)
        hys.append(hy)
        cys.append(cy)
        h = hy                                   # module quirk: carry hy only
    return jnp.stack(hys), jnp.stack(cys)


if __name__ == "__main__":
    B, D, H, T = 16, 64, 256, 8
    TN = 128                                     # gate/hidden tile (lane-aligned)

    key = jax.random.PRNGKey(0)
    kx, kh, ks, kwx, kbx, kwh, kbh = jax.random.split(key, 7)

    x = jax.random.normal(kx, (B, D), dtype=jnp.float32)
    hidden = jax.random.normal(kh, (B, H), dtype=jnp.float32)
    xs = jax.random.normal(ks, (T, B, D), dtype=jnp.float32)

    # nn.Linear-shaped params: x2h.weight [4H, D], x2h.bias [4H],
    #                          h2h.weight [4H, H], h2h.bias [4H].
    bound_x = 1.0 / (D ** 0.5)
    bound_h = 1.0 / (H ** 0.5)
    wx = jax.random.uniform(kwx, (4 * H, D), jnp.float32, -bound_x, bound_x)
    bx = jax.random.uniform(kbx, (4 * H,), jnp.float32, -bound_x, bound_x)
    wh = jax.random.uniform(kwh, (4 * H, H), jnp.float32, -bound_h, bound_h)
    bh = jax.random.uniform(kbh, (4 * H,), jnp.float32, -bound_h, bound_h)

    # One-time packing (outside the per-step path).
    w_x_t, w_h_t, b_t = prepare_lstm_params(wx, bx, wh, bh, tile_n=TN)
    w_x_s, w_h_s, b_s = prepare_lstm_params(wx, bx, wh, bh)  # plain [i|f|g|o]

    # --- single step (exact LSTMcell.forward semantics) ---
    hy, cy = lstm_cell(x, hidden, w_x_t, w_h_t, b_t, tile_n=TN)
    jax.block_until_ready((hy, cy))
    hy_ref, cy_ref = _reference_step(x, hidden, wx, bx, wh, bh)
    assert hy.shape == (B, H) and cy.shape == (B, H)
    assert cy.dtype == jnp.float32
    assert jnp.allclose(hy, hy_ref, atol=2e-3, rtol=2e-3)
    assert jnp.allclose(cy, cy_ref, atol=2e-3, rtol=2e-3)

    # --- fused sequence (time loop inside one pallas_call) ---
    hy_seq, cy_seq = lstm_sequence(xs, hidden, w_x_s, w_h_s, b_s)
    jax.block_until_ready((hy_seq, cy_seq))
    hy_seq_ref, cy_seq_ref = _reference_sequence(xs, hidden, wx, bx, wh, bh)
    assert hy_seq.shape == (T, B, H) and cy_seq.shape == (T, B, H)
    assert cy_seq.dtype == jnp.float32
    assert jnp.allclose(hy_seq, hy_seq_ref, atol=3e-3, rtol=3e-3)
    assert jnp.allclose(cy_seq, cy_seq_ref, atol=3e-3, rtol=3e-3)

    print("KERNEL_OK")
</pallas_src>

<mosaic_0001>
module attributes {stable_mosaic.version = 11 : i64} {
  func.func @lstm_cell_kernel(%arg0: i32, %arg1: i32, %arg2: memref<16x64xbf16, #tpu.memory_space<vmem>>, %arg3: memref<16x256xbf16, #tpu.memory_space<vmem>>, %arg4: memref<16x128xf32, #tpu.memory_space<vmem>>, %arg5: memref<64x512xbf16, #tpu.memory_space<vmem>>, %arg6: memref<256x512xbf16, #tpu.memory_space<vmem>>, %arg7: memref<1x512xf32, #tpu.memory_space<vmem>>, %arg8: memref<16x128xf32, #tpu.memory_space<vmem>>, %arg9: memref<16x128xf32, #tpu.memory_space<vmem>>) attributes {dimension_semantics = [#tpu.dimension_semantics<parallel>, #tpu.dimension_semantics<parallel>], iteration_bounds = array<i64: 2, 1>, scalar_prefetch = 0 : i64, scratch_operands = 0 : i64, tpu.core_type = #tpu.core_type<tc>, window_params = [{transform_indices = @transform_0, window_bounds = array<i64: 16, 64>}, {transform_indices = @transform_1, window_bounds = array<i64: 16, 256>}, {transform_indices = @transform_2, window_bounds = array<i64: 16, 128>}, {transform_indices = @transform_3, window_bounds = array<i64: 64, 512>}, {transform_indices = @transform_4, window_bounds = array<i64: 256, 512>}, {transform_indices = @transform_5, window_bounds = array<i64: 1, 512>}, {transform_indices = @transform_6, window_bounds = array<i64: 16, 128>}, {transform_indices = @transform_7, window_bounds = array<i64: 16, 128>}]} {
    %c0 = arith.constant 0 : index
    %c0_0 = arith.constant 0 : index
    %0 = vector.load %arg2[%c0, %c0_0] : memref<16x64xbf16, #tpu.memory_space<vmem>>, vector<16x64xbf16>
    %c0_1 = arith.constant 0 : index
    %c0_2 = arith.constant 0 : index
    %1 = vector.load %arg5[%c0_1, %c0_2] : memref<64x512xbf16, #tpu.memory_space<vmem>>, vector<64x512xbf16>
    %cst = arith.constant dense<0.000000e+00> : vector<16x512xf32>
    %2 = tpu.matmul %0, %1, %cst {dimension_numbers = #tpu.dot_dimension_numbers<[1], [0], [0], [1], [0, 0, 1, 1], [], []>} : vector<16x64xbf16>, vector<64x512xbf16>, vector<16x512xf32> -> vector<16x512xf32>
    %c0_3 = arith.constant 0 : index
    %c0_4 = arith.constant 0 : index
    %3 = vector.load %arg3[%c0_3, %c0_4] : memref<16x256xbf16, #tpu.memory_space<vmem>>, vector<16x256xbf16>
    %c0_5 = arith.constant 0 : index
    %c0_6 = arith.constant 0 : index
    %4 = vector.load %arg6[%c0_5, %c0_6] : memref<256x512xbf16, #tpu.memory_space<vmem>>, vector<256x512xbf16>
    %cst_7 = arith.constant dense<0.000000e+00> : vector<16x512xf32>
    %5 = tpu.matmul %3, %4, %cst_7 {dimension_numbers = #tpu.dot_dimension_numbers<[1], [0], [0], [1], [0, 0, 1, 1], [], []>} : vector<16x256xbf16>, vector<256x512xbf16>, vector<16x512xf32> -> vector<16x512xf32>
    %6 = arith.addf %2, %5 : vector<16x512xf32>
    %c0_8 = arith.constant 0 : index
    %c0_9 = arith.constant 0 : index
    %7 = vector.load %arg7[%c0_8, %c0_9] : memref<1x512xf32, #tpu.memory_space<vmem>>, vector<1x512xf32>
    %8 = vector.broadcast %7 : vector<1x512xf32> to vector<16x512xf32>
    %9 = arith.addf %6, %8 : vector<16x512xf32>
    %10 = vector.extract_strided_slice %9 {offsets = [0, 0], sizes = [16, 128], strides = [1, 1]} : vector<16x512xf32> to vector<16x128xf32>
    %cst_10 = arith.constant 5.000000e-01 : f32
    %11 = vector.broadcast %cst_10 : f32 to vector<16x128xf32>
    %12 = arith.mulf %11, %10 : vector<16x128xf32>
    %13 = math.tanh %12 : vector<16x128xf32>
    %cst_11 = arith.constant 5.000000e-01 : f32
    %14 = vector.broadcast %cst_11 : f32 to vector<16x128xf32>
    %15 = arith.mulf %14, %13 : vector<16x128xf32>
    %cst_12 = arith.constant 5.000000e-01 : f32
    %16 = vector.broadcast %cst_12 : f32 to vector<16x128xf32>
    %17 = arith.addf %15, %16 : vector<16x128xf32>
    %18 = vector.extract_strided_slice %9 {offsets = [0, 128], sizes = [16, 128], strides = [1, 1]} : vector<16x512xf32> to vector<16x128xf32>
    %cst_13 = arith.constant 5.000000e-01 : f32
    %19 = vector.broadcast %cst_13 : f32 to vector<16x128xf32>
    %20 = arith.mulf %19, %18 : vector<16x128xf32>
    %21 = math.tanh %20 : vector<16x128xf32>
    %cst_14 = arith.constant 5.000000e-01 : f32
    %22 = vector.broadcast %cst_14 : f32 to vector<16x128xf32>
    %23 = arith.mulf %22, %21 : vector<16x128xf32>
    %cst_15 = arith.constant 5.000000e-01 : f32
    %24 = vector.broadcast %cst_15 : f32 to vector<16x128xf32>
    %25 = arith.addf %23, %24 : vector<16x128xf32>
    %26 = vector.extract_strided_slice %9 {offsets = [0, 256], sizes = [16, 128], strides = [1, 1]} : vector<16x512xf32> to vector<16x128xf32>
    %27 = math.tanh %26 : vector<16x128xf32>
    %28 = vector.extract_strided_slice %9 {offsets = [0, 384], sizes = [16, 128], strides = [1, 1]} : vector<16x512xf32> to vector<16x128xf32>
    %cst_16 = arith.constant 5.000000e-01 : f32
    %29 = vector.broadcast %cst_16 : f32 to vector<16x128xf32>
    %30 = arith.mulf %29, %28 : vector<16x128xf32>
    %31 = math.tanh %30 : vector<16x128xf32>
    %cst_17 = arith.constant 5.000000e-01 : f32
    %32 = vector.broadcast %cst_17 : f32 to vector<16x128xf32>
    %33 = arith.mulf %32, %31 : vector<16x128xf32>
    %cst_18 = arith.constant 5.000000e-01 : f32
    %34 = vector.broadcast %cst_18 : f32 to vector<16x128xf32>
    %35 = arith.addf %33, %34 : vector<16x128xf32>
    %c0_19 = arith.constant 0 : index
    %c0_20 = arith.constant 0 : index
    %36 = vector.load %arg4[%c0_19, %c0_20] : memref<16x128xf32, #tpu.memory_space<vmem>>, vector<16x128xf32>
    %37 = arith.mulf %36, %25 : vector<16x128xf32>
    %38 = arith.mulf %17, %27 : vector<16x128xf32>
    %39 = arith.addf %37, %38 : vector<16x128xf32>
    %40 = math.tanh %39 : vector<16x128xf32>
    %41 = arith.mulf %35, %40 : vector<16x128xf32>
    %c0_21 = arith.constant 0 : index
    %c0_22 = arith.constant 0 : index
    %42 = vector.load %arg8[%c0_21, %c0_22] : memref<16x128xf32, #tpu.memory_space<vmem>>, vector<16x128xf32>
    tpu.vector_store %arg8[%c0_21, %c0_22], %41 {strides = array<i32>} : memref<16x128xf32, #tpu.memory_space<vmem>>, vector<16x128xf32>,
    %c0_23 = arith.constant 0 : index
    %c0_24 = arith.constant 0 : index
    %43 = vector.load %arg9[%c0_23, %c0_24] : memref<16x128xf32, #tpu.memory_space<vmem>>, vector<16x128xf32>
    tpu.vector_store %arg9[%c0_23, %c0_24], %39 {strides = array<i32>} : memref<16x128xf32, #tpu.memory_space<vmem>>, vector<16x128xf32>,
    return
  }
  func.func @transform_0(%arg0: i32, %arg1: i32) -> (i32, i32) {
    %c0_i32 = arith.constant 0 : i32
    %c0_i32_0 = arith.constant 0 : i32
    return %arg1, %c0_i32 : i32, i32
  }
  func.func @transform_1(%arg0: i32, %arg1: i32) -> (i32, i32) {
    %c0_i32 = arith.constant 0 : i32
    %c0_i32_0 = arith.constant 0 : i32
    return %arg1, %c0_i32 : i32, i32
  }
  func.func @transform_2(%arg0: i32, %arg1: i32) -> (i32, i32) {
    %c0_i32 = arith.constant 0 : i32
    return %arg1, %arg0 : i32, i32
  }
  func.func @transform_3(%arg0: i32, %arg1: i32) -> (i32, i32) {
    %c0_i32 = arith.constant 0 : i32
    %c0_i32_0 = arith.constant 0 : i32
    return %c0_i32, %arg0 : i32, i32
  }
  func.func @transform_4(%arg0: i32, %arg1: i32) -> (i32, i32) {
    %c0_i32 = arith.constant 0 : i32
    %c0_i32_0 = arith.constant 0 : i32
    return %c0_i32, %arg0 : i32, i32
  }
  func.func @transform_5(%arg0: i32, %arg1: i32) -> (i32, i32) {
    %c0_i32 = arith.constant 0 : i32
    %c0_i32_0 = arith.constant 0 : i32
    return %c0_i32, %arg0 : i32, i32
  }
  func.func @transform_6(%arg0: i32, %arg1: i32) -> (i32, i32) {
    %c0_i32 = arith.constant 0 : i32
    return %arg1, %arg0 : i32, i32
  }
  func.func @transform_7(%arg0: i32, %arg1: i32) -> (i32, i32) {
    %c0_i32 = arith.constant 0 : i32
    return %arg1, %arg0 : i32, i32
  }
}

</mosaic_0001>

<llo_original>
// kernel: lstm_cell.1
$region0: #{lstm_cell.1}
  #allocation0 [shape = 'u32[]', space=smem, size = 0x4, offset = 0x4, fixed_abs, tag = 'smem constant byte address 0x4 - core index']
  #allocation1 [shape = 'u32[144,128]{1,0:T(1,128)}', space=vmem, size = 0x12000, scoped, tag = 'internal scratch']
  %s0 = inlined_call_operand.vmem [shape: bf16[16,64], index: 0, kind: input, shape index: {}]
  %s1 = inlined_call_operand.vmem [shape: bf16[16,256], index: 1, kind: input, shape index: {}]
  %s2 = inlined_call_operand.vmem [shape: f32[16,256], index: 2, kind: input, shape index: {}]
  %s3 = inlined_call_operand.hbm [shape: bf16[64,1024], index: 3, kind: input, shape index: {}]
  %s4 = inlined_call_operand.hbm [shape: bf16[256,1024], index: 4, kind: input, shape index: {}]
  %s5 = inlined_call_operand.vmem [shape: f32[1,1024], index: 5, kind: input, shape index: {}]
  %s6 = inlined_call_operand.hbm [shape: f32[16,256], index: 6, kind: output, shape index: {0}]
  %s7 = inlined_call_operand.hbm [shape: f32[16,256], index: 7, kind: output, shape index: {1}]
  %8 = xla_tuple %s6, %s7
  %s9 = sld [smem:[#allocation0]]
  $region111: #{lstm_cell.1} parent=0
    _
  %s11 = ssub.s32 1, %s9
  %s12 = scalar_select 0, %s11, %s9
  $region1: #{lstm_cell.1} parent=0
    #allocation2 [shape = 'u8[16384]{0}', space=vmem, size = 0x4000, scoped, tag = 'input window, operand 2']
    #allocation3 [shape = 'u8[131072]{0}', space=vmem, size = 0x20000, scoped, tag = 'input window, operand 3']
    #allocation4 [shape = 's32[2]{0}', space=sflag, size = 0x8, scoped, tag = 'scoped memory for lstm_cell.1']
    #allocation5 [shape = 's32[2]{0}', space=sflag, size = 0x8, scoped, tag = 'scoped memory for lstm_cell.1']
    #allocation6 [shape = 'u8[524288]{0}', space=vmem, size = 0x80000, scoped, tag = 'input window, operand 4']
    #allocation7 [shape = 's32[2]{0}', space=sflag, size = 0x8, scoped, tag = 'scoped memory for lstm_cell.1']
    #allocation8 [shape = 'u8[16384]{0}', space=vmem, size = 0x4000, scoped, tag = 'output window, operand 0']
    #allocation9 [shape = 'u8[16384]{0}', space=vmem, size = 0x4000, scoped, tag = 'output window, operand 1']
    #allocation10 [shape = 's32[2]{0}', space=sflag, size = 0x8, scoped, tag = 'scoped memory for lstm_cell.1']
    %13 = vsyncpa [#allocation4], 0
    %s14 = scalar_lea.sflag [#allocation4], 1
    %15 = vsyncpa %s14, 0
    %16 = vsyncpa [#allocation7], 0
    %s17 = scalar_lea.sflag [#allocation7], 1
    %18 = vsyncpa %s17, 0
    %19 = vsyncpa [#allocation5], 0
    %s20 = scalar_lea.sflag [#allocation5], 1
    %21 = vsyncpa %s20, 0
    %22 = vsyncpa [#allocation10], 0
    %s23 = scalar_lea.sflag [#allocation10], 1
    %24 = vsyncpa %s23, 0
    loop: start=0, step=1, limit=4
    $region2: #{lstm_cell.1} parent=1 // loop_pre_header
      _
    $region3: #{lstm_cell.1} parent=1 // loop_header
      %s26 = sphi 0, %s30
      %p27 = scmp.ge.s32.totalorder %s26, 4
      %s33 = sphi 0, %s45
      %s34 = sphi 0, %s41
      %s35 = sphi 0, %s33
      %s36 = sphi 0, %s34
      %s37 = sphi 0, %s35
      %s38 = sphi 0, %s36
      %s48 = sphi 0, %s50
      %s51 = sphi 0, %s48
      %s52 = sphi 0, %s51
      %s68 = sphi 0, %s52
      %s74 = sphi 0, %s76
      %s77 = sphi 0, %s74
      %s78 = sphi 0, %s77
      %s94 = sphi 0, %s78
      %s102 = sphi 0, %s104
      %s105 = sphi 0, %s102
      %s106 = sphi 0, %s105
      %s122 = sphi 0, %s106
      %s128 = sphi 0, %s130
      %s131 = sphi 0, %s128
      %s132 = sphi 0, %s131
      %s148 = sphi 0, %s132
      %s154 = sphi 0, %s156
      %s157 = sphi 0, %s154
      %s158 = sphi 0, %s157
      %s174 = sphi 0, %s158
      %s180 = sphi 0, %s182
      %s183 = sphi 0, %s180
      %s184 = sphi 0, %s183
      %s200 = sphi 0, %s184
      %s208 = sphi 0, %s210
      %s211 = sphi 0, %s208
      %s212 = sphi 0, %s211
      %s228 = sphi 0, %s212
      %s236 = sphi 0, %s238
      %s239 = sphi 0, %s236
      %s240 = sphi 0, %s239
      %s256 = sphi 0, %s240
    $region4: #{lstm_cell.1} parent=1 // loop_header_branch
      %29 = sbr.rel (%p27) target = $region8
    $region5: #{lstm_cell.1} parent=1 // loop_body
      %s31 = ssub.s32 %s26, 1
      %s32 = ssub.s32 %s26, 2
      %s39 = sadd.s32 1, %s34
      %p40 = scmp.ge.s32.totalorder %s39, 1
      %s41 = scalar_select %p40, 0, %s39
      %s42 = sadd.s32 1, %s33
      %s43 = scalar_select %p40, %s42, %s33
      %p44 = scmp.ge.s32.totalorder %s43, 2
      %s45 = scalar_select %p44, 0, %s43
      %s46 = ssub.s32 %s34, %s41
      %p47 = scmp.eq.s32.totalorder %s46, 0
      %s49 = sadd.s32 %s48, 1
      %s50 = scalar_select %p47, %s48, %s49
      %p53 = pneg %p47
      %p54 = scmp.eq.s32.totalorder %s26, 1
      %p55 = por %p53, %p54
      %p56 = scmp.ne.s32.totalorder %s48, %s51
      %p57 = scmp.eq.s32.totalorder %s26, 0
      %p58 = por %p56, %p57
      %p59 = scmp.ne.s32.totalorder %s48, %s51
      %p60 = scmp.eq.s32.totalorder %s31, 1
      %p61 = por %p59, %p60
      %p62 = scmp.ne.s32.totalorder %s51, %s52
      %p63 = scmp.eq.s32.totalorder %s31, 0
      %p64 = por %p62, %p63
      %p65 = scmp.ne.s32.totalorder %s51, %s52
      %p66 = scmp.eq.s32.totalorder %s32, 1
      %p67 = por %p65, %p66
      %p69 = scmp.ne.s32.totalorder %s52, %s68
      %p70 = scmp.eq.s32.totalorder %s32, 0
      %p71 = por %p69, %p70
      %s72 = ssub.s32 %s34, %s41
      %p73 = scmp.eq.s32.totalorder %s72, 0
      %s75 = sadd.s32 %s74, 1
      %s76 = scalar_select %p73, %s74, %s75
      %p79 = pneg %p73
      %p80 = scmp.eq.s32.totalorder %s26, 1
      %p81 = por %p79, %p80
      %p82 = scmp.ne.s32.totalorder %s74, %s77
      %p83 = scmp.eq.s32.totalorder %s26, 0
      %p84 = por %p82, %p83
      %p85 = scmp.ne.s32.totalorder %s74, %s77
      %p86 = scmp.eq.s32.totalorder %s31, 1
      %p87 = por %p85, %p86
      %p88 = scmp.ne.s32.totalorder %s77, %s78
      %p89 = scmp.eq.s32.totalorder %s31, 0
      %p90 = por %p88, %p89
      %p91 = scmp.ne.s32.totalorder %s77, %s78
      %p92 = scmp.eq.s32.totalorder %s32, 1
      %p93 = por %p91, %p92
      %p95 = scmp.ne.s32.totalorder %s78, %s94
      %p96 = scmp.eq.s32.totalorder %s32, 0
      %p97 = por %p95, %p96
      %s98 = ssub.s32 %s34, %s41
      %s99 = ssub.s32 %s33, %s45
      %s100 = sor.u32 %s98, %s99
      %p101 = scmp.eq.s32.totalorder %s100, 0
      %s103 = sadd.s32 %s102, 1
      %s104 = scalar_select %p101, %s102, %s103
      %p107 = pneg %p101
      %p108 = scmp.eq.s32.totalorder %s26, 1
      %p109 = por %p107, %p108
      %p110 = scmp.ne.s32.totalorder %s102, %s105
      %p111 = scmp.eq.s32.totalorder %s26, 0
      %p112 = por %p110, %p111
      %p113 = scmp.ne.s32.totalorder %s102, %s105
      %p114 = scmp.eq.s32.totalorder %s31, 1
      %p115 = por %p113, %p114
      %p116 = scmp.ne.s32.totalorder %s105, %s106
      %p117 = scmp.eq.s32.totalorder %s31, 0
      %p118 = por %p116, %p117
      %p119 = scmp.ne.s32.totalorder %s105, %s106
      %p120 = scmp.eq.s32.totalorder %s32, 1
      %p121 = por %p119, %p120
      %p123 = scmp.ne.s32.totalorder %s106, %s122
      %p124 = scmp.eq.s32.totalorder %s32, 0
      %p125 = por %p123, %p124
      %s126 = ssub.s32 %s33, %s45
      %p127 = scmp.eq.s32.totalorder %s126, 0
      %s129 = sadd.s32 %s128, 1
      %s130 = scalar_select %p127, %s128, %s129
      %p133 = pneg %p127
      %p134 = scmp.eq.s32.totalorder %s26, 1
      %p135 = por %p133, %p134
      %p136 = scmp.ne.s32.totalorder %s128, %s131
      %p137 = scmp.eq.s32.totalorder %s26, 0
      %p138 = por %p136, %p137
      %p139 = scmp.ne.s32.totalorder %s128, %s131
      %p140 = scmp.eq.s32.totalorder %s31, 1
      %p141 = por %p139, %p140
      %p142 = scmp.ne.s32.totalorder %s131, %s132
      %p143 = scmp.eq.s32.totalorder %s31, 0
      %p144 = por %p142, %p143
      %p145 = scmp.ne.s32.totalorder %s131, %s132
      %p146 = scmp.eq.s32.totalorder %s32, 1
      %p147 = por %p145, %p146
      %p149 = scmp.ne.s32.totalorder %s132, %s148
      %p150 = scmp.eq.s32.totalorder %s32, 0
      %p151 = por %p149, %p150
      %s152 = ssub.s32 %s33, %s45
      %p153 = scmp.eq.s32.totalorder %s152, 0
      %s155 = sadd.s32 %s154, 1
      %s156 = scalar_select %p153, %s154, %s155
      %p159 = pneg %p153
      %p160 = scmp.eq.s32.totalorder %s26, 1
      %p161 = por %p159, %p160
      %p162 = scmp.ne.s32.totalorder %s154, %s157
      %p163 = scmp.eq.s32.totalorder %s26, 0
      %p164 = por %p162, %p163
      %p165 = scmp.ne.s32.totalorder %s154, %s157
      %p166 = scmp.eq.s32.totalorder %s31, 1
      %p167 = por %p165, %p166
      %p168 = scmp.ne.s32.totalorder %s157, %s158
      %p169 = scmp.eq.s32.totalorder %s31, 0
      %p170 = por %p168, %p169
      %p171 = scmp.ne.s32.totalorder %s157, %s158
      %p172 = scmp.eq.s32.totalorder %s32, 1
      %p173 = por %p171, %p172
      %p175 = scmp.ne.s32.totalorder %s158, %s174
      %p176 = scmp.eq.s32.totalorder %s32, 0
      %p177 = por %p175, %p176
      %s178 = ssub.s32 %s33, %s45
      %p179 = scmp.eq.s32.totalorder %s178, 0
      %s181 = sadd.s32 %s180, 1
      %s182 = scalar_select %p179, %s180, %s181
      %p185 = pneg %p179
      %p186 = scmp.eq.s32.totalorder %s26, 1
      %p187 = por %p185, %p186
      %p188 = scmp.ne.s32.totalorder %s180, %s183
      %p189 = scmp.eq.s32.totalorder %s26, 0
      %p190 = por %p188, %p189
      %p191 = scmp.ne.s32.totalorder %s180, %s183
      %p192 = scmp.eq.s32.totalorder %s31, 1
      %p193 = por %p191, %p192
      %p194 = scmp.ne.s32.totalorder %s183, %s184
      %p195 = scmp.eq.s32.totalorder %s31, 0
      %p196 = por %p194, %p195
      %p197 = scmp.ne.s32.totalorder %s183, %s184
      %p198 = scmp.eq.s32.totalorder %s32, 1
      %p199 = por %p197, %p198
      %p201 = scmp.ne.s32.totalorder %s184, %s200
      %p202 = scmp.eq.s32.totalorder %s32, 0
      %p203 = por %p201, %p202
      %s204 = ssub.s32 %s34, %s41
      %s205 = ssub.s32 %s33, %s45
      %s206 = sor.u32 %s204, %s205
      %p207 = scmp.eq.s32.totalorder %s206, 0
      %s209 = sadd.s32 %s208, 1
      %s210 = scalar_select %p207, %s208, %s209
      %p213 = pneg %p207
      %p214 = scmp.eq.s32.totalorder %s26, 1
      %p215 = por %p213, %p214
      %p216 = scmp.ne.s32.totalorder %s208, %s211
      %p217 = scmp.eq.s32.totalorder %s26, 0
      %p218 = por %p216, %p217
      %p219 = scmp.ne.s32.totalorder %s208, %s211
      %p220 = scmp.eq.s32.totalorder %s31, 1
      %p221 = por %p219, %p220
      %p222 = scmp.ne.s32.totalorder %s211, %s212
      %p223 = scmp.eq.s32.totalorder %s31, 0
      %p224 = por %p222, %p223
      %p225 = scmp.ne.s32.totalorder %s211, %s212
      %p226 = scmp.eq.s32.totalorder %s32, 1
      %p227 = por %p225, %p226
      %p229 = scmp.ne.s32.totalorder %s212, %s228
      %p230 = scmp.eq.s32.totalorder %s32, 0
      %p231 = por %p229, %p230
      %s232 = ssub.s32 %s34, %s41
      %s233 = ssub.s32 %s33, %s45
      %s234 = sor.u32 %s232, %s233
      %p235 = scmp.eq.s32.totalorder %s234, 0
      %s237 = sadd.s32 %s236, 1
      %s238 = scalar_select %p235, %s236, %s237
      %p241 = pneg %p235
      %p242 = scmp.eq.s32.totalorder %s26, 1
      %p243 = por %p241, %p242
      %p244 = scmp.ne.s32.totalorder %s236, %s239
      %p245 = scmp.eq.s32.totalorder %s26, 0
      %p246 = por %p244, %p245
      %p247 = scmp.ne.s32.totalorder %s236, %s239
      %p248 = scmp.eq.s32.totalorder %s31, 1
      %p249 = por %p247, %p248
      %p250 = scmp.ne.s32.totalorder %s239, %s240
      %p251 = scmp.eq.s32.totalorder %s31, 0
      %p252 = por %p250, %p251
      %p253 = scmp.ne.s32.totalorder %s239, %s240
      %p254 = scmp.eq.s32.totalorder %s32, 1
      %p255 = por %p253, %p254
      %p257 = scmp.ne.s32.totalorder %s240, %s256
      %p258 = scmp.eq.s32.totalorder %s32, 0
      %p259 = por %p257, %p258
      %p260 = scmp.le.s32.totalorder 1, %s26
      %p261 = scmp.lt.s32.totalorder %s26, 3
      %p262 = pnand %p260, %p261
      %p263 = pneg %p262
      // Predicated region
      $region9: #{lstm_cell.1} parent=5 // pred_check
        _
      $region10: #{lstm_cell.1} parent=5 // pred_check_branch
        %265 = sbr.rel (%p262) target = $region12
      $region11: #{lstm_cell.1} parent=5 // pred_region
        %s266 = ssub.s32 %s26, 1
        // Predicated region
        $region13: #{lstm_cell.1} parent=11 // pred_check
          %p267 = pneg %p64
        $region14: #{lstm_cell.1} parent=11 // pred_check_branch
          %269 = sbr.rel (%p267) target = $region16
        $region15: #{lstm_cell.1} parent=11 // pred_region
          %s270 = smul.u32 2, %s36
          %p271 = scmp.lt.s32.totalorder %s270, 1
          %s272 = scalar_select %p271, %s270, 1
          %s273 = smul.addr %s272, 4
          %s274 = scalar_lea.vmem %s0, %s273
          %s275 = smul.u32 2, %s36
        $region16: #{lstm_cell.1} parent=11 // pred_fallthru
          _
        // Predicated region
        $region17: #{lstm_cell.1} parent=11 // pred_check
          %p276 = pneg %p90
        $region18: #{lstm_cell.1} parent=11 // pred_check_branch
          %278 = sbr.rel (%p276) target = $region20
        $region19: #{lstm_cell.1} parent=11 // pred_region
          %s279 = smul.u32 2, %s36
          %p280 = scmp.lt.s32.totalorder %s279, 1
          %s281 = scalar_select %p280, %s279, 1
          %s282 = smul.addr %s281, 2
          %s283 = smul.addr %s282, 4
          %s284 = scalar_lea.vmem %s1, %s283
          %s285 = smul.u32 2, %s36
        $region20: #{lstm_cell.1} parent=11 // pred_fallthru
          _
      $region12: #{lstm_cell.1} parent=5 // pred_fallthru
        _
      %p286 = scmp.lt.s32.totalorder %s26, 2
      // Predicated region
      $region21: #{lstm_cell.1} parent=5 // pred_check
        %p287 = pneg %p286
      $region22: #{lstm_cell.1} parent=5 // pred_check_branch
        %289 = sbr.rel (%p287) target = $region24
      $region23: #{lstm_cell.1} parent=5 // pred_region
        // Predicated region
        $region25: #{lstm_cell.1} parent=23 // pred_check
          %p290 = pneg %p112
        $region26: #{lstm_cell.1} parent=23 // pred_check_branch
          %292 = sbr.rel (%p290) target = $region28
        $region27: #{lstm_cell.1} parent=23 // pred_region
          %s293 = sand.u32 %s102, 1
          %s294 = sand.u32 %s102, 1
          %s295 = smul.addr %s294, 16
          %s296 = scalar_lea.vmem [#allocation2], %s295
          %s297 = smul.u32 2, %s34
          %s298 = smul.addr %s297, 2
          %s299 = sadd.s32 %s33, %s298
          %s300 = smul.addr %s299, 8
          %s301 = scalar_lea.vmem %s2, %s300
          // Predicated region
          $region29: #{lstm_cell.1} parent=27 // pred_check
            _
          $region30: #{lstm_cell.1} parent=27 // pred_check_branch
            %303 = sbr.rel (0) target = $region32
          $region31: #{lstm_cell.1} parent=27 // pred_region
            // Predicated region
            $region33: #{lstm_cell.1} parent=31 // pred_check
              _
            $region34: #{lstm_cell.1} parent=31 // pred_check_branch
              %305 = sbr.rel (0) target = $region36
            $region35: #{lstm_cell.1} parent=31 // pred_region
              // Predicated region
              $region48: #{lstm_cell.1} parent=35 // pred_check
                _
              $region49: #{lstm_cell.1} parent=35 // pred_check_branch
                %322 = sbr.rel (0) target = $region51
              $region50: #{lstm_cell.1} parent=35 // pred_region
                loop: start=0, step=1, limit=1
                $region52: #{lstm_cell.1} parent=50 // loop_pre_header
                  _
                $region53: #{lstm_cell.1} parent=50 // loop_header
                  %s324 = sphi 0, %s328
                  %p325 = scmp.ge.s32.totalorder %s324, 1
                  %s329 = sphi %s301, %s301
                  %s330 = sphi %s296, %s296
                $region54: #{lstm_cell.1} parent=50 // loop_header_branch
                  %327 = sbr.rel (%p325) target = $region58
                $region55: #{lstm_cell.1} parent=50 // loop_body
                  %v331 = vld [vmem:[%s329] sm:$0xff]
                  %332 = vst [vmem:[%s330] sm:$0xff] %v331
                  %v333 = vld [vmem:[%s329 + $0x10] sm:$0xff]
                  %334 = vst [vmem:[%s330 + $0x8] sm:$0xff] %v333
                $region56: #{lstm_cell.1} parent=50 // loop_footer
                  %s328 = sadd.s32 1, %s324
                $region57: #{lstm_cell.1} parent=50 // loop_footer_branch
                  %323 = sbr.rel target = $region53
                $region58: #{lstm_cell.1} parent=50 // loop_exit
                  _
              $region51: #{lstm_cell.1} parent=35 // pred_fallthru
                _
              // Predicated region
              $region59: #{lstm_cell.1} parent=35 // pred_check
                _
              $region60: #{lstm_cell.1} parent=35 // pred_check_branch
                %336 = sbr.rel target = $region62
              $region61: #{lstm_cell.1} parent=35 // pred_region
                _
              $region62: #{lstm_cell.1} parent=35 // pred_fallthru
                _
            $region36: #{lstm_cell.1} parent=31 // pred_fallthru
              _
            // Predicated region
            $region37: #{lstm_cell.1} parent=31 // pred_check
              _
            $region38: #{lstm_cell.1} parent=31 // pred_check_branch
              %307 = sbr.rel target = $region40
            $region39: #{lstm_cell.1} parent=31 // pred_region
              loop: start=0, step=1, limit=1
              $region41: #{lstm_cell.1} parent=39 // loop_pre_header
                _
              $region42: #{lstm_cell.1} parent=39 // loop_header
                %s310 = sphi 0, %s314
                %p311 = scmp.ge.s32.totalorder %s310, 1
                %s315 = sphi %s301, %s301
                %s316 = sphi %s296, %s296
              $region43: #{lstm_cell.1} parent=39 // loop_header_branch
                %313 = sbr.rel (%p311) target = $region47
              $region44: #{lstm_cell.1} parent=39 // loop_body
                %v317 = vld [vmem:[%s315] sm:$0xff]
                %318 = vst [vmem:[%s316] sm:$0xff] %v317
                %v319 = vld [vmem:[%s315 + $0x10] sm:$0xff]
                %320 = vst [vmem:[%s316 + $0x8] sm:$0xff] %v319
              $region45: #{lstm_cell.1} parent=39 // loop_footer
                %s314 = sadd.s32 1, %s310
              $region46: #{lstm_cell.1} parent=39 // loop_footer_branch
                %309 = sbr.rel target = $region42
              $region47: #{lstm_cell.1} parent=39 // loop_exit
                _
            $region40: #{lstm_cell.1} parent=31 // pred_fallthru
              _
          $region32: #{lstm_cell.1} parent=27 // pred_fallthru
            _
          %337 = vnop
        $region28: #{lstm_cell.1} parent=23 // pred_fallthru
          _
        // Predicated region
        $region63: #{lstm_cell.1} parent=23 // pred_check
          %p338 = pneg %p138
        $region64: #{lstm_cell.1} parent=23 // pred_check_branch
          %340 = sbr.rel (%p338) target = $region66
        $region65: #{lstm_cell.1} parent=23 // pred_region
          %s341 = sand.u32 %s128, 1
          %s342 = scalar_lea.sflag [#allocation4], %s341
          %s343 = sand.u32 %s128, 1
          %s344 = smul.addr %s343, 128
          %s345 = scalar_lea.vmem [#allocation3], %s344
          %s346 = smul.u32 4, %s33
          %s348 = ssub.s32 2048, 2048
          %349 = vsyncadd %s342, %s348
          %s350 = smul.addr %s346, 64
          %s351 = scalar_lea.hbm %s3, %s350
          %s352 = sshll.u32 %s345, 4
          %s353 = int_to_ptr.vmem [resolvable:$true] %s352
          %358 = dma.hbm_to_vmem [thread:$0]  %s351, 2048, %s353, %s342, 512, 256, 16
        $region66: #{lstm_cell.1} parent=23 // pred_fallthru
          _
        // Predicated region
        $region67: #{lstm_cell.1} parent=23 // pred_check
          %p359 = pneg %p164
        $region68: #{lstm_cell.1} parent=23 // pred_check_branch
          %361 = sbr.rel (%p359) target = $region70
        $region69: #{lstm_cell.1} parent=23 // pred_region
          %s362 = sand.u32 %s154, 1
          %s363 = scalar_lea.sflag [#allocation7], %s362
          %s364 = sand.u32 %s154, 1
          %s365 = smul.addr %s364, 512
          %s366 = scalar_lea.vmem [#allocation6], %s365
          %s367 = smul.u32 4, %s33
          %s369 = ssub.s32 8192, 8192
          %370 = vsyncadd %s363, %s369
          %s371 = smul.addr %s367, 64
          %s372 = scalar_lea.hbm %s4, %s371
          %s373 = sshll.u32 %s366, 4
          %s374 = int_to_ptr.vmem [resolvable:$true] %s373
          %379 = dma.hbm_to_vmem [thread:$0]  %s372, 8192, %s374, %s363, 512, 256, 16
        $region70: #{lstm_cell.1} parent=23 // pred_fallthru
          _
        // Predicated region
        $region71: #{lstm_cell.1} parent=23 // pred_check
          %p380 = pneg %p190
        $region72: #{lstm_cell.1} parent=23 // pred_check_branch
          %382 = sbr.rel (%p380) target = $region74
        $region73: #{lstm_cell.1} parent=23 // pred_region
          %s383 = smul.u32 4, %s33
          %p384 = scmp.lt.s32.totalorder %s383, 7
          %s385 = scalar_select %p384, %s383, 7
          %s386 = scalar_lea.vmem %s5, %s385
          %s387 = smul.u32 4, %s33
        $region74: #{lstm_cell.1} parent=23 // pred_fallthru
          _
      $region24: #{lstm_cell.1} parent=5 // pred_fallthru
        _
      %p388 = scmp.le.s32.totalorder 1, %s26
      %p389 = scmp.lt.s32.totalorder %s26, 3
      %p390 = pnand %p388, %p389
      %p391 = pneg %p390
      // Predicated region
      $region75: #{lstm_cell.1} parent=5 // pred_check
        _
      $region76: #{lstm_cell.1} parent=5 // pred_check_branch
        %393 = sbr.rel (%p390) target = $region78
      $region77: #{lstm_cell.1} parent=5 // pred_region
        %s394 = ssub.s32 %s26, 1
        %s395 = sand.u32 %s105, 1
        %s396 = sand.u32 %s105, 1
        %s397 = smul.addr %s396, 16
        %s398 = scalar_lea.vmem [#allocation2], %s397
        // Predicated region
        $region79: #{lstm_cell.1} parent=77 // pred_check
          %p399 = pneg %p118
        $region80: #{lstm_cell.1} parent=77 // pred_check_branch
          %401 = sbr.rel (%p399) target = $region82
        $region81: #{lstm_cell.1} parent=77 // pred_region
          _
        $region82: #{lstm_cell.1} parent=77 // pred_fallthru
          _
        %s402 = sand.u32 %s131, 1
        %s403 = scalar_lea.sflag [#allocation4], %s402
        %s404 = sand.u32 %s131, 1
        %s405 = smul.addr %s404, 128
        %s406 = scalar_lea.vmem [#allocation3], %s405
        // Predicated region
        $region83: #{lstm_cell.1} parent=77 // pred_check
          %p407 = pneg %p144
        $region84: #{lstm_cell.1} parent=77 // pred_check_branch
          %409 = sbr.rel (%p407) target = $region86
        $region85: #{lstm_cell.1} parent=77 // pred_region
          %410 = dma.done %s403, 2048
        $region86: #{lstm_cell.1} parent=77 // pred_fallthru
          _
        %s411 = sand.u32 %s157, 1
        %s412 = scalar_lea.sflag [#allocation7], %s411
        %s413 = sand.u32 %s157, 1
        %s414 = smul.addr %s413, 512
        %s415 = scalar_lea.vmem [#allocation6], %s414
        // Predicated region
        $region87: #{lstm_cell.1} parent=77 // pred_check
          %p416 = pneg %p170
        $region88: #{lstm_cell.1} parent=77 // pred_check_branch
          %418 = sbr.rel (%p416) target = $region90
        $region89: #{lstm_cell.1} parent=77 // pred_region
          %419 = dma.done %s412, 8192
        $region90: #{lstm_cell.1} parent=77 // pred_fallthru
          _
        %s420 = smul.u32 2, %s36
        %p421 = scmp.lt.s32.totalorder %s420, 1
        %s422 = scalar_select %p421, %s420, 1
        %s423 = smul.addr %s422, 4
        %s424 = scalar_lea.vmem %s0, %s423
        %p425 = pneg %p64
        %p426 = pneg %p61
        %s427 = smul.u32 2, %s36
        %p428 = scmp.lt.s32.totalorder %s427, 1
        %s429 = scalar_select %p428, %s427, 1
        %s430 = smul.addr %s429, 2
        %s431 = smul.addr %s430, 4
        %s432 = scalar_lea.vmem %s1, %s431
        %p433 = pneg %p90
        %p434 = pneg %p87
        %s435 = sand.u32 %s105, 1
        %s436 = sand.u32 %s105, 1
        %s437 = smul.addr %s436, 16
        %s438 = scalar_lea.vmem [#allocation2], %s437
        %p439 = pneg %p118
        %p440 = pneg %p115
        %s441 = sand.u32 %s131, 1
        %s442 = scalar_lea.sflag [#allocation4], %s441
        %s443 = sand.u32 %s131, 1
        %s444 = smul.addr %s443, 128
        %s445 = scalar_lea.vmem [#allocation3], %s444
        %p446 = pneg %p144
        %p447 = pneg %p141
        %s448 = sand.u32 %s157, 1
        %s449 = scalar_lea.sflag [#allocation7], %s448
        %s450 = sand.u32 %s157, 1
        %s451 = smul.addr %s450, 512
        %s452 = scalar_lea.vmem [#allocation6], %s451
        %p453 = pneg %p170
        %p454 = pneg %p167
        %s455 = smul.u32 4, %s35
        %p456 = scmp.lt.s32.totalorder %s455, 7
        %s457 = scalar_select %p456, %s455, 7
        %s458 = scalar_lea.vmem %s5, %s457
        %p459 = pneg %p196
        %p460 = pneg %p193
        %p461 = pneg %p224
        %p462 = pneg %p221
        %s463 = sand.u32 %s211, 1
        %s464 = scalar_lea.sflag [#allocation5], %s463
        %s465 = sand.u32 %s211, 1
        %s466 = smul.addr %s465, 16
        %s467 = scalar_lea.vmem [#allocation8], %s466
        %p468 = pneg %p252
        %p469 = pneg %p249
        %s470 = sand.u32 %s239, 1
        %s471 = scalar_lea.sflag [#allocation10], %s470
        %s472 = sand.u32 %s239, 1
        %s473 = smul.addr %s472, 16
        %s474 = scalar_lea.vmem [#allocation9], %s473
        %s475 = smul.u32 2, %s36
        %p476 = scmp.lt.s32.totalorder %s475, 1
        %s477 = scalar_select %p476, %s475, 1
        %s478 = smul.addr %s477, 4
        %s479 = scalar_lea.vmem %s0, %s478
        %s480 = smul.u32 2, %s36
        %s481 = smul.u32 2, %s36
        %p482 = scmp.lt.s32.totalorder %s481, 1
        %s483 = scalar_select %p482, %s481, 1
        %s484 = smul.addr %s483, 2
        %s485 = smul.addr %s484, 4
        %s486 = scalar_lea.vmem %s1, %s485
        %s487 = smul.u32 2, %s36
        %s488 = smul.u32 2, %s36
        %s489 = smul.u32 4, %s35
        %s490 = smul.u32 4, %s35
        %s491 = smul.u32 4, %s35
        %p492 = scmp.lt.s32.totalorder %s491, 7
        %s493 = scalar_select %p492, %s491, 7
        %s494 = scalar_lea.vmem %s5, %s493
        %s495 = smul.u32 4, %s35
        %s496 = smul.u32 2, %s36
        %s497 = smul.u32 2, %s36
        %v499 = vld [vmem:[%s479] sm:$0xf]
        %v500 = vld [vmem:[%s479 + $0x4] sm:$0xf]
        %v501 = vld [vmem:[%s406] sm:$0xff]
        %v502 = vld [vmem:[%s406 + $0x8] sm:$0xff]
        %v503 = vld [vmem:[%s406 + $0x10] sm:$0xff]
        %v504 = vld [vmem:[%s406 + $0x18] sm:$0xff]
        %v505 = vld [vmem:[%s406 + $0x20] sm:$0xff]
        %v506 = vld [vmem:[%s406 + $0x28] sm:$0xff]
        %v507 = vld [vmem:[%s406 + $0x30] sm:$0xff]
        %v508 = vld [vmem:[%s406 + $0x38] sm:$0xff]
        %v509 = vld [vmem:[%s406 + $0x40] sm:$0xff]
        %v510 = vld [vmem:[%s406 + $0x48] sm:$0xff]
        %v511 = vld [vmem:[%s406 + $0x50] sm:$0xff]
        %v512 = vld [vmem:[%s406 + $0x58] sm:$0xff]
        %v513 = vld [vmem:[%s406 + $0x60] sm:$0xff]
        %v514 = vld [vmem:[%s406 + $0x68] sm:$0xff]
        %v515 = vld [vmem:[%s406 + $0x70] sm:$0xff]
        %v516 = vld [vmem:[%s406 + $0x78] sm:$0xff]
        %v517 = vld [vmem:[%s486] sm:$0xff]
        %v518 = vld [vmem:[%s486 + $0x8] sm:$0xff]
        %v519 = vld [vmem:[%s415] sm:$0xff]
        %v520 = vld [vmem:[%s415 + $0x8] sm:$0xff]
        %v521 = vld [vmem:[%s415 + $0x10] sm:$0xff]
        %v522 = vld [vmem:[%s415 + $0x18] sm:$0xff]
        %v523 = vld [vmem:[%s415 + $0x20] sm:$0xff]
        %v524 = vld [vmem:[%s415 + $0x28] sm:$0xff]
        %v525 = vld [vmem:[%s415 + $0x30] sm:$0xff]
        %v526 = vld [vmem:[%s415 + $0x38] sm:$0xff]
        %v527 = vld [vmem:[%s415 + $0x40] sm:$0xff]
        %v528 = vld [vmem:[%s415 + $0x48] sm:$0xff]
        %v529 = vld [vmem:[%s415 + $0x50] sm:$0xff]
        %v530 = vld [vmem:[%s415 + $0x58] sm:$0xff]
        %v531 = vld [vmem:[%s415 + $0x60] sm:$0xff]
        %v532 = vld [vmem:[%s415 + $0x68] sm:$0xff]
        %v533 = vld [vmem:[%s415 + $0x70] sm:$0xff]
        %v534 = vld [vmem:[%s415 + $0x78] sm:$0xff]
        %v535 = vld [vmem:[%s415 + $0x80] sm:$0xff]
        %v536 = vld [vmem:[%s415 + $0x88] sm:$0xff]
        %v537 = vld [vmem:[%s415 + $0x90] sm:$0xff]
        %v538 = vld [vmem:[%s415 + $0x98] sm:$0xff]
        %v539 = vld [vmem:[%s415 + $0xa0] sm:$0xff]
        %v540 = vld [vmem:[%s415 + $0xa8] sm:$0xff]
        %v541 = vld [vmem:[%s415 + $0xb0] sm:$0xff]
        %v542 = vld [vmem:[%s415 + $0xb8] sm:$0xff]
        %v543 = vld [vmem:[%s415 + $0xc0] sm:$0xff]
        %v544 = vld [vmem:[%s415 + $0xc8] sm:$0xff]
        %v545 = vld [vmem:[%s415 + $0xd0] sm:$0xff]
        %v546 = vld [vmem:[%s415 + $0xd8] sm:$0xff]
        %v547 = vld [vmem:[%s415 + $0xe0] sm:$0xff]
        %v548 = vld [vmem:[%s415 + $0xe8] sm:$0xff]
        %v549 = vld [vmem:[%s415 + $0xf0] sm:$0xff]
        %v550 = vld [vmem:[%s415 + $0xf8] sm:$0xff]
        %v551 = vld [vmem:[%s415 + $0x100] sm:$0xff]
        %v552 = vld [vmem:[%s415 + $0x108] sm:$0xff]
        %v553 = vld [vmem:[%s415 + $0x110] sm:$0xff]
        %v554 = vld [vmem:[%s415 + $0x118] sm:$0xff]
        %v555 = vld [vmem:[%s415 + $0x120] sm:$0xff]
        %v556 = vld [vmem:[%s415 + $0x128] sm:$0xff]
        %v557 = vld [vmem:[%s415 + $0x130] sm:$0xff]
        %v558 = vld [vmem:[%s415 + $0x138] sm:$0xff]
        %v559 = vld [vmem:[%s415 + $0x140] sm:$0xff]
        %v560 = vld [vmem:[%s415 + $0x148] sm:$0xff]
        %v561 = vld [vmem:[%s415 + $0x150] sm:$0xff]
        %v562 = vld [vmem:[%s415 + $0x158] sm:$0xff]
        %v563 = vld [vmem:[%s415 + $0x160] sm:$0xff]
        %v564 = vld [vmem:[%s415 + $0x168] sm:$0xff]
        %v565 = vld [vmem:[%s415 + $0x170] sm:$0xff]
        %v566 = vld [vmem:[%s415 + $0x178] sm:$0xff]
        %v567 = vld [vmem:[%s415 + $0x180] sm:$0xff]
        %v568 = vld [vmem:[%s415 + $0x188] sm:$0xff]
        %v569 = vld [vmem:[%s415 + $0x190] sm:$0xff]
        %v570 = vld [vmem:[%s415 + $0x198] sm:$0xff]
        %v571 = vld [vmem:[%s415 + $0x1a0] sm:$0xff]
        %v572 = vld [vmem:[%s415 + $0x1a8] sm:$0xff]
        %v573 = vld [vmem:[%s415 + $0x1b0] sm:$0xff]
        %v574 = vld [vmem:[%s415 + $0x1b8] sm:$0xff]
        %v575 = vld [vmem:[%s415 + $0x1c0] sm:$0xff]
        %v576 = vld [vmem:[%s415 + $0x1c8] sm:$0xff]
        %v577 = vld [vmem:[%s415 + $0x1d0] sm:$0xff]
        %v578 = vld [vmem:[%s415 + $0x1d8] sm:$0xff]
        %v579 = vld [vmem:[%s415 + $0x1e0] sm:$0xff]
        %v580 = vld [vmem:[%s415 + $0x1e8] sm:$0xff]
        %v581 = vld [vmem:[%s415 + $0x1f0] sm:$0xff]
        %v582 = vld [vmem:[%s415 + $0x1f8] sm:$0xff]
        %v585 = vunpack.c.l.b16 %v517
        %v586 = vunpack.c.h.b16 %v517
        %v587 = vunpack.c.l.b16 %v518
        %v588 = vunpack.c.h.b16 %v518
        %v589 = vpack.c.b16 %v587, %v585
        %v590 = vpack.c.b16 %v588, %v586
        %v657 = vunpack.c.l.b16 %v519
        %v658 = vunpack.c.h.b16 %v519
        %v659 = vunpack.c.l.b16 %v520
        %v660 = vunpack.c.h.b16 %v520
        %v661 = vunpack.c.l.b16 %v521
        %v662 = vunpack.c.h.b16 %v521
        %v663 = vunpack.c.l.b16 %v522
        %v664 = vunpack.c.h.b16 %v522
        %v665 = vunpack.c.l.b16 %v523
        %v666 = vunpack.c.h.b16 %v523
        %v667 = vunpack.c.l.b16 %v524
        %v668 = vunpack.c.h.b16 %v524
        %v669 = vunpack.c.l.b16 %v525
        %v670 = vunpack.c.h.b16 %v525
        %v671 = vunpack.c.l.b16 %v526
        %v672 = vunpack.c.h.b16 %v526
        %v673 = vunpack.c.l.b16 %v527
        %v674 = vunpack.c.h.b16 %v527
        %v675 = vunpack.c.l.b16 %v528
        %v676 = vunpack.c.h.b16 %v528
        %v677 = vunpack.c.l.b16 %v529
        %v678 = vunpack.c.h.b16 %v529
        %v679 = vunpack.c.l.b16 %v530
        %v680 = vunpack.c.h.b16 %v530
        %v681 = vunpack.c.l.b16 %v531
        %v682 = vunpack.c.h.b16 %v531
        %v683 = vunpack.c.l.b16 %v532
        %v684 = vunpack.c.h.b16 %v532
        %v685 = vunpack.c.l.b16 %v533
        %v686 = vunpack.c.h.b16 %v533
        %v687 = vunpack.c.l.b16 %v534
        %v688 = vunpack.c.h.b16 %v534
        %v689 = vunpack.c.l.b16 %v535
        %v690 = vunpack.c.h.b16 %v535
        %v691 = vunpack.c.l.b16 %v536
        %v692 = vunpack.c.h.b16 %v536
        %v693 = vunpack.c.l.b16 %v537
        %v694 = vunpack.c.h.b16 %v537
        %v695 = vunpack.c.l.b16 %v538
        %v696 = vunpack.c.h.b16 %v538
        %v697 = vunpack.c.l.b16 %v539
        %v698 = vunpack.c.h.b16 %v539
        %v699 = vunpack.c.l.b16 %v540
        %v700 = vunpack.c.h.b16 %v540
        %v701 = vunpack.c.l.b16 %v541
        %v702 = vunpack.c.h.b16 %v541
        %v703 = vunpack.c.l.b16 %v542
        %v704 = vunpack.c.h.b16 %v542
        %v705 = vunpack.c.l.b16 %v543
        %v706 = vunpack.c.h.b16 %v543
        %v707 = vunpack.c.l.b16 %v544
        %v708 = vunpack.c.h.b16 %v544
        %v709 = vunpack.c.l.b16 %v545
        %v710 = vunpack.c.h.b16 %v545
        %v711 = vunpack.c.l.b16 %v546
        %v712 = vunpack.c.h.b16 %v546
        %v713 = vunpack.c.l.b16 %v547
        %v714 = vunpack.c.h.b16 %v547
        %v715 = vunpack.c.l.b16 %v548
        %v716 = vunpack.c.h.b16 %v548
        %v717 = vunpack.c.l.b16 %v549
        %v718 = vunpack.c.h.b16 %v549
        %v719 = vunpack.c.l.b16 %v550
        %v720 = vunpack.c.h.b16 %v550
        %v721 = vunpack.c.l.b16 %v551
        %v722 = vunpack.c.h.b16 %v551
        %v723 = vunpack.c.l.b16 %v552
        %v724 = vunpack.c.h.b16 %v552
        %v725 = vunpack.c.l.b16 %v553
        %v726 = vunpack.c.h.b16 %v553
        %v727 = vunpack.c.l.b16 %v554
        %v728 = vunpack.c.h.b16 %v554
        %v729 = vunpack.c.l.b16 %v555
        %v730 = vunpack.c.h.b16 %v555
        %v731 = vunpack.c.l.b16 %v556
        %v732 = vunpack.c.h.b16 %v556
        %v733 = vunpack.c.l.b16 %v557
        %v734 = vunpack.c.h.b16 %v557
        %v735 = vunpack.c.l.b16 %v558
        %v736 = vunpack.c.h.b16 %v558
        %v737 = vunpack.c.l.b16 %v559
        %v738 = vunpack.c.h.b16 %v559
        %v739 = vunpack.c.l.b16 %v560
        %v740 = vunpack.c.h.b16 %v560
        %v741 = vunpack.c.l.b16 %v561
        %v742 = vunpack.c.h.b16 %v561
        %v743 = vunpack.c.l.b16 %v562
        %v744 = vunpack.c.h.b16 %v562
        %v745 = vunpack.c.l.b16 %v563
        %v746 = vunpack.c.h.b16 %v563
        %v747 = vunpack.c.l.b16 %v564
        %v748 = vunpack.c.h.b16 %v564
        %v749 = vunpack.c.l.b16 %v565
        %v750 = vunpack.c.h.b16 %v565
        %v751 = vunpack.c.l.b16 %v566
        %v752 = vunpack.c.h.b16 %v566
        %v753 = vunpack.c.l.b16 %v567
        %v754 = vunpack.c.h.b16 %v567
        %v755 = vunpack.c.l.b16 %v568
        %v756 = vunpack.c.h.b16 %v568
        %v757 = vunpack.c.l.b16 %v569
        %v758 = vunpack.c.h.b16 %v569
        %v759 = vunpack.c.l.b16 %v570
        %v760 = vunpack.c.h.b16 %v570
        %v761 = vunpack.c.l.b16 %v571
        %v762 = vunpack.c.h.b16 %v571
        %v763 = vunpack.c.l.b16 %v572
        %v764 = vunpack.c.h.b16 %v572
        %v765 = vunpack.c.l.b16 %v573
        %v766 = vunpack.c.h.b16 %v573
        %v767 = vunpack.c.l.b16 %v574
        %v768 = vunpack.c.h.b16 %v574
        %v769 = vunpack.c.l.b16 %v575
        %v770 = vunpack.c.h.b16 %v575
        %v771 = vunpack.c.l.b16 %v576
        %v772 = vunpack.c.h.b16 %v576
        %v773 = vunpack.c.l.b16 %v577
        %v774 = vunpack.c.h.b16 %v577
        %v775 = vunpack.c.l.b16 %v578
        %v776 = vunpack.c.h.b16 %v578
        %v777 = vunpack.c.l.b16 %v579
        %v778 = vunpack.c.h.b16 %v579
        %v779 = vunpack.c.l.b16 %v580
        %v780 = vunpack.c.h.b16 %v580
        %v781 = vunpack.c.l.b16 %v581
        %v782 = vunpack.c.h.b16 %v581
        %v783 = vunpack.c.l.b16 %v582
        %v784 = vunpack.c.h.b16 %v582
        %v785 = vpack.c.b16 %v661, %v657
        %v786 = vpack.c.b16 %v662, %v658
        %v787 = vpack.c.b16 %v663, %v659
        %v788 = vpack.c.b16 %v664, %v660
        %v789 = vpack.c.b16 %v669, %v665
        %v790 = vpack.c.b16 %v670, %v666
        %v791 = vpack.c.b16 %v671, %v667
        %v792 = vpack.c.b16 %v672, %v668
        %v793 = vpack.c.b16 %v677, %v673
        %v794 = vpack.c.b16 %v678, %v674
        %v795 = vpack.c.b16 %v679, %v675
        %v796 = vpack.c.b16 %v680, %v676
        %v797 = vpack.c.b16 %v685, %v681
        %v798 = vpack.c.b16 %v686, %v682
        %v799 = vpack.c.b16 %v687, %v683
        %v800 = vpack.c.b16 %v688, %v684
        %v801 = vpack.c.b16 %v693, %v689
        %v802 = vpack.c.b16 %v694, %v690
        %v803 = vpack.c.b16 %v695, %v691
        %v804 = vpack.c.b16 %v696, %v692
        %v805 = vpack.c.b16 %v701, %v697
        %v806 = vpack.c.b16 %v702, %v698
        %v807 = vpack.c.b16 %v703, %v699
        %v808 = vpack.c.b16 %v704, %v700
        %v809 = vpack.c.b16 %v709, %v705
        %v810 = vpack.c.b16 %v710, %v706
        %v811 = vpack.c.b16 %v711, %v707
        %v812 = vpack.c.b16 %v712, %v708
        %v813 = vpack.c.b16 %v717, %v713
        %v814 = vpack.c.b16 %v718, %v714
        %v815 = vpack.c.b16 %v719, %v715
        %v816 = vpack.c.b16 %v720, %v716
        %v817 = vpack.c.b16 %v725, %v721
        %v818 = vpack.c.b16 %v726, %v722
        %v819 = vpack.c.b16 %v727, %v723
        %v820 = vpack.c.b16 %v728, %v724
        %v821 = vpack.c.b16 %v733, %v729
        %v822 = vpack.c.b16 %v734, %v730
        %v823 = vpack.c.b16 %v735, %v731
        %v824 = vpack.c.b16 %v736, %v732
        %v825 = vpack.c.b16 %v741, %v737
        %v826 = vpack.c.b16 %v742, %v738
        %v827 = vpack.c.b16 %v743, %v739
        %v828 = vpack.c.b16 %v744, %v740
        %v829 = vpack.c.b16 %v749, %v745
        %v830 = vpack.c.b16 %v750, %v746
        %v831 = vpack.c.b16 %v751, %v747
        %v832 = vpack.c.b16 %v752, %v748
        %v833 = vpack.c.b16 %v757, %v753
        %v834 = vpack.c.b16 %v758, %v754
        %v835 = vpack.c.b16 %v759, %v755
        %v836 = vpack.c.b16 %v760, %v756
        %v837 = vpack.c.b16 %v765, %v761
        %v838 = vpack.c.b16 %v766, %v762
        %v839 = vpack.c.b16 %v767, %v763
        %v840 = vpack.c.b16 %v768, %v764
        %v841 = vpack.c.b16 %v773, %v769
        %v842 = vpack.c.b16 %v774, %v770
        %v843 = vpack.c.b16 %v775, %v771
        %v844 = vpack.c.b16 %v776, %v772
        %v845 = vpack.c.b16 %v781, %v777
        %v846 = vpack.c.b16 %v782, %v778
        %v847 = vpack.c.b16 %v783, %v779
        %v848 = vpack.c.b16 %v784, %v780
        %913 = vmatprep.subr.bf16.mxu0 %v786
        %914 = vmatpush1.bf16.msra.mxu0 %v785
        %915 = vmatprep.subr.bf16.mxu0 %v790
        %916 = vmatpush1.bf16.msra.mxu0 %v789
        %917 = vmatprep.subr.bf16.mxu0 %v794
        %918 = vmatpush1.bf16.msra.mxu0 %v793
        %919 = vmatprep.subr.bf16.mxu0 %v798
        %920 = vmatpush1.bf16.msra.mxu0 %v797
        %921 = vmatprep.subr.bf16.mxu0 %v802
        %922 = vmatpush1.bf16.msra.mxu0 %v801
        %923 = vmatprep.subr.bf16.mxu0 %v806
        %924 = vmatpush1.bf16.msra.mxu0 %v805
        %925 = vmatprep.subr.bf16.mxu0 %v810
        %926 = vmatpush1.bf16.msra.mxu0 %v809
        %927 = vmatprep.subr.bf16.mxu0 %v814
        %928 = vmatpush1.bf16.msra.mxu0 %v813
        %929 = vmatprep.subr.bf16.mxu0 %v818
        %930 = vmatpush1.bf16.msra.mxu0 %v817
        %931 = vmatprep.subr.bf16.mxu0 %v822
        %932 = vmatpush1.bf16.msra.mxu0 %v821
        %933 = vmatprep.subr.bf16.mxu0 %v826
        %934 = vmatpush1.bf16.msra.mxu0 %v825
        %935 = vmatprep.subr.bf16.mxu0 %v830
        %936 = vmatpush1.bf16.msra.mxu0 %v829
        %937 = vmatprep.subr.bf16.mxu0 %v834
        %938 = vmatpush1.bf16.msra.mxu0 %v833
        %939 = vmatprep.subr.bf16.mxu0 %v838
        %940 = vmatpush1.bf16.msra.mxu0 %v837
        %941 = vmatprep.subr.bf16.mxu0 %v842
        %942 = vmatpush1.bf16.msra.mxu0 %v841
        %943 = vmatprep.subr.bf16.mxu0 %v846
        %944 = vmatpush1.bf16.msra.mxu0 %v845
        %945 = vmatprep.mubr.bf16.mxu0 %v590
        %946 = vmatmul.mubr.bf16.gmra.mrb[0].mxu0 %v589
        %v947 = vpop.f32.mrb[0].mxu0
        %v948 = vadd.f32 0.0, %v947
        %v949 = vpop.f32.mrb[0].mxu0
        %v950 = vadd.f32 0.0, %v949
        %v951 = vpop.f32.mrb[0].mxu0
        %v952 = vadd.f32 0.0, %v951
        %v953 = vpop.f32.mrb[0].mxu0
        %v954 = vadd.f32 0.0, %v953
        %955 = vdwg.mxu0
        %956 = vmatprep.subr.bf16.mxu0 %v788
        %957 = vmatpush1.bf16.msra.mxu0 %v787
        %958 = vmatprep.subr.bf16.mxu0 %v792
        %959 = vmatpush1.bf16.msra.mxu0 %v791
        %960 = vmatprep.subr.bf16.mxu0 %v796
        %961 = vmatpush1.bf16.msra.mxu0 %v795
        %962 = vmatprep.subr.bf16.mxu0 %v800
        %963 = vmatpush1.bf16.msra.mxu0 %v799
        %964 = vmatprep.subr.bf16.mxu0 %v804
        %965 = vmatpush1.bf16.msra.mxu0 %v803
        %966 = vmatprep.subr.bf16.mxu0 %v808
        %967 = vmatpush1.bf16.msra.mxu0 %v807
        %968 = vmatprep.subr.bf16.mxu0 %v812
        %969 = vmatpush1.bf16.msra.mxu0 %v811
        %970 = vmatprep.subr.bf16.mxu0 %v816
        %971 = vmatpush1.bf16.msra.mxu0 %v815
        %972 = vmatprep.subr.bf16.mxu0 %v820
        %973 = vmatpush1.bf16.msra.mxu0 %v819
        %974 = vmatprep.subr.bf16.mxu0 %v824
        %975 = vmatpush1.bf16.msra.mxu0 %v823
        %976 = vmatprep.subr.bf16.mxu0 %v828
        %977 = vmatpush1.bf16.msra.mxu0 %v827
        %978 = vmatprep.subr.bf16.mxu0 %v832
        %979 = vmatpush1.bf16.msra.mxu0 %v831
        %980 = vmatprep.subr.bf16.mxu0 %v836
        %981 = vmatpush1.bf16.msra.mxu0 %v835
        %982 = vmatprep.subr.bf16.mxu0 %v840
        %983 = vmatpush1.bf16.msra.mxu0 %v839
        %984 = vmatprep.subr.bf16.mxu0 %v844
        %985 = vmatpush1.bf16.msra.mxu0 %v843
        %986 = vmatprep.subr.bf16.mxu0 %v848
        %987 = vmatpush1.bf16.msra.mxu0 %v847
        %988 = vmatprep.mubr.bf16.mxu0 %v590
        %989 = vmatmul.mubr.bf16.gmra.mrb[0].mxu0 %v589
        %v990 = vpop.f32.mrb[0].mxu0
        %v991 = vadd.f32 0.0, %v990
        %v992 = vpop.f32.mrb[0].mxu0
        %v993 = vadd.f32 0.0, %v992
        %v994 = vpop.f32.mrb[0].mxu0
        %v995 = vadd.f32 0.0, %v994
        %v996 = vpop.f32.mrb[0].mxu0
        %v997 = vadd.f32 0.0, %v996
        %998 = vdwg.mxu0
        %v1001 = vunpack.c.l.b16 %v499
        %v1002 = vunpack.c.l.b16 %v500
        %v1003 = vpack.c.b16 %v1002, %v1001
        %v1020 = vunpack.c.l.b16 %v501
        %v1021 = vunpack.c.h.b16 %v501
        %v1022 = vunpack.c.l.b16 %v502
        %v1023 = vunpack.c.h.b16 %v502
        %v1024 = vunpack.c.l.b16 %v503
        %v1025 = vunpack.c.h.b16 %v503
        %v1026 = vunpack.c.l.b16 %v504
        %v1027 = vunpack.c.h.b16 %v504
        %v1028 = vunpack.c.l.b16 %v505
        %v1029 = vunpack.c.h.b16 %v505
        %v1030 = vunpack.c.l.b16 %v506
        %v1031 = vunpack.c.h.b16 %v506
        %v1032 = vunpack.c.l.b16 %v507
        %v1033 = vunpack.c.h.b16 %v507
        %v1034 = vunpack.c.l.b16 %v508
        %v1035 = vunpack.c.h.b16 %v508
        %v1036 = vunpack.c.l.b16 %v509
        %v1037 = vunpack.c.h.b16 %v509
        %v1038 = vunpack.c.l.b16 %v510
        %v1039 = vunpack.c.h.b16 %v510
        %v1040 = vunpack.c.l.b16 %v511
        %v1041 = vunpack.c.h.b16 %v511
        %v1042 = vunpack.c.l.b16 %v512
        %v1043 = vunpack.c.h.b16 %v512
        %v1044 = vunpack.c.l.b16 %v513
        %v1045 = vunpack.c.h.b16 %v513
        %v1046 = vunpack.c.l.b16 %v514
        %v1047 = vunpack.c.h.b16 %v514
        %v1048 = vunpack.c.l.b16 %v515
        %v1049 = vunpack.c.h.b16 %v515
        %v1050 = vunpack.c.l.b16 %v516
        %v1051 = vunpack.c.h.b16 %v516
        %v1052 = vpack.c.b16 %v1024, %v1020
        %v1053 = vpack.c.b16 %v1025, %v1021
        %v1054 = vpack.c.b16 %v1026, %v1022
        %v1055 = vpack.c.b16 %v1027, %v1023
        %v1056 = vpack.c.b16 %v1032, %v1028
        %v1057 = vpack.c.b16 %v1033, %v1029
        %v1058 = vpack.c.b16 %v1034, %v1030
        %v1059 = vpack.c.b16 %v1035, %v1031
        %v1060 = vpack.c.b16 %v1040, %v1036
        %v1061 = vpack.c.b16 %v1041, %v1037
        %v1062 = vpack.c.b16 %v1042, %v1038
        %v1063 = vpack.c.b16 %v1043, %v1039
        %v1064 = vpack.c.b16 %v1048, %v1044
        %v1065 = vpack.c.b16 %v1049, %v1045
        %v1066 = vpack.c.b16 %v1050, %v1046
        %v1067 = vpack.c.b16 %v1051, %v1047
        %vm1084 = vcmask 523264
        %v1086 = vsel %vm1084, %v1003, 0
        %1088 = vmatprep.subr.bf16.mxu0 %v1053
        %1089 = vmatpush1.bf16.msra.mxu0 %v1052
        %1090 = vmatprep.subr.bf16.mxu0 %v1057
        %1091 = vmatpush1.bf16.msra.mxu0 %v1056
        %1092 = vmatprep.subr.bf16.mxu0 %v1061
        %1093 = vmatpush1.bf16.msra.mxu0 %v1060
        %1094 = vmatprep.subr.bf16.mxu0 %v1065
        %1095 = vmatpush1.bf16.msra.mxu0 %v1064
        %1096 = vmatprep.subr.bf16.mxu0 0
        %1097 = vmatpush1.bf16.msra.mxu0 0
        %1098 = vmatprep.subr.bf16.mxu0 0
        %1099 = vmatpush1.bf16.msra.mxu0 0
        %1100 = vmatprep.subr.bf16.mxu0 0
        %1101 = vmatpush1.bf16.msra.mxu0 0
        %1102 = vmatprep.subr.bf16.mxu0 0
        %1103 = vmatpush1.bf16.msra.mxu0 0
        %1104 = vmatprep.subr.bf16.mxu0 0
        %1105 = vmatpush1.bf16.msra.mxu0 0
        %1106 = vmatprep.subr.bf16.mxu0 0
        %1107 = vmatpush1.bf16.msra.mxu0 0
        %1108 = vmatprep.subr.bf16.mxu0 0
        %1109 = vmatpush1.bf16.msra.mxu0 0
        %1110 = vmatprep.subr.bf16.mxu0 0
        %1111 = vmatpush1.bf16.msra.mxu0 0
        %1112 = vmatprep.subr.bf16.mxu0 0
        %1113 = vmatpush1.bf16.msra.mxu0 0
        %1114 = vmatprep.subr.bf16.mxu0 0
        %1115 = vmatpush1.bf16.msra.mxu0 0
        %1116 = vmatprep.subr.bf16.mxu0 0
        %1117 = vmatpush1.bf16.msra.mxu0 0
        %1118 = vmatprep.subr.bf16.mxu0 0
        %1119 = vmatpush1.bf16.msra.mxu0 0
        %1120 = vmatprep.mubr.bf16.mxu0 0
        %1121 = vmatmul.mubr.bf16.gmra.mrb[0].mxu0 %v1086
        %v1122 = vpop.f32.mrb[0].mxu0
        %v1123 = vadd.f32 %v948, %v1122
        %v1124 = vpop.f32.mrb[0].mxu0
        %v1125 = vadd.f32 %v950, %v1124
        %v1126 = vpop.f32.mrb[0].mxu0
        %v1127 = vadd.f32 %v952, %v1126
        %v1128 = vpop.f32.mrb[0].mxu0
        %v1129 = vadd.f32 %v954, %v1128
        %1130 = vdwg.mxu0
        %1131 = vmatprep.subr.bf16.mxu0 %v1055
        %1132 = vmatpush1.bf16.msra.mxu0 %v1054
        %1133 = vmatprep.subr.bf16.mxu0 %v1059
        %1134 = vmatpush1.bf16.msra.mxu0 %v1058
        %1135 = vmatprep.subr.bf16.mxu0 %v1063
        %1136 = vmatpush1.bf16.msra.mxu0 %v1062
        %1137 = vmatprep.subr.bf16.mxu0 %v1067
        %1138 = vmatpush1.bf16.msra.mxu0 %v1066
        %1139 = vmatprep.subr.bf16.mxu0 0
        %1140 = vmatpush1.bf16.msra.mxu0 0
        %1141 = vmatprep.subr.bf16.mxu0 0
        %1142 = vmatpush1.bf16.msra.mxu0 0
        %1143 = vmatprep.subr.bf16.mxu0 0
        %1144 = vmatpush1.bf16.msra.mxu0 0
        %1145 = vmatprep.subr.bf16.mxu0 0
        %1146 = vmatpush1.bf16.msra.mxu0 0
        %1147 = vmatprep.subr.bf16.mxu0 0
        %1148 = vmatpush1.bf16.msra.mxu0 0
        %1149 = vmatprep.subr.bf16.mxu0 0
        %1150 = vmatpush1.bf16.msra.mxu0 0
        %1151 = vmatprep.subr.bf16.mxu0 0
        %1152 = vmatpush1.bf16.msra.mxu0 0
        %1153 = vmatprep.subr.bf16.mxu0 0
        %1154 = vmatpush1.bf16.msra.mxu0 0
        %1155 = vmatprep.subr.bf16.mxu0 0
        %1156 = vmatpush1.bf16.msra.mxu0 0
        %1157 = vmatprep.subr.bf16.mxu0 0
        %1158 = vmatpush1.bf16.msra.mxu0 0
        %1159 = vmatprep.subr.bf16.mxu0 0
        %1160 = vmatpush1.bf16.msra.mxu0 0
        %1161 = vmatprep.subr.bf16.mxu0 0
        %1162 = vmatpush1.bf16.msra.mxu0 0
        %1163 = vmatprep.mubr.bf16.mxu0 0
        %1164 = vmatmul.mubr.bf16.gmra.mrb[0].mxu0 %v1086
        %v1165 = vpop.f32.mrb[0].mxu0
        %v1166 = vadd.f32 %v991, %v1165
        %v1167 = vpop.f32.mrb[0].mxu0
        %v1168 = vadd.f32 %v993, %v1167
        %v1169 = vpop.f32.mrb[0].mxu0
        %v1170 = vadd.f32 %v995, %v1169
        %v1171 = vpop.f32.mrb[0].mxu0
        %v1172 = vadd.f32 %v997, %v1171
        %1173 = vdwg.mxu0
        %v1174 = vld [vmem:[%s494] sm:$0xf]
        %v1176 = vlaneseq
        %v1177 = vshrl.u32 %v1176, 7
        %v1178 = vsub.s32 0, %v1177
        %v1179 = vrot.slane %v1174, %v1178
        %v1180 = vlaneseq
        %v1181 = vshrl.u32 %v1180, 7
        %v1182 = vsub.s32 1, %v1181
        %v1183 = vrot.slane %v1174, %v1182
        %v1184 = vlaneseq
        %v1185 = vshrl.u32 %v1184, 7
        %v1186 = vsub.s32 2, %v1185
        %v1187 = vrot.slane %v1174, %v1186
        %v1188 = vlaneseq
        %v1189 = vshrl.u32 %v1188, 7
        %v1190 = vsub.s32 3, %v1189
        %v1191 = vrot.slane %v1174, %v1190
        %v1196 = vadd.f32 %v1123, %v1179
        %v1197 = vadd.f32 %v1125, %v1183
        %v1198 = vadd.f32 %v1166, %v1187
        %v1199 = vadd.f32 %v1168, %v1191
        %v1200 = vadd.f32 %v1127, %v1179
        %v1201 = vadd.f32 %v1129, %v1183
        %v1202 = vadd.f32 %v1170, %v1187
        %v1203 = vadd.f32 %v1172, %v1191
        %v1204 = vmul.f32 %v1196, 0.5
        %v1205 = vmul.f32 %v1200, 0.5
        %v1206 = vtanh.pop %v1204
        %v1207 = vtanh.pop %v1205
        %v1208 = vmul.f32 %v1206, 0.5
        %v1209 = vmul.f32 %v1207, 0.5
        %v1210 = vadd.f32 %v1208, 0.5
        %v1211 = vadd.f32 %v1209, 0.5
        %v1212 = vmul.f32 %v1197, 0.5
        %v1213 = vmul.f32 %v1201, 0.5
        %v1214 = vtanh.pop %v1212
        %v1215 = vtanh.pop %v1213
        %v1216 = vmul.f32 %v1214, 0.5
        %v1217 = vmul.f32 %v1215, 0.5
        %v1218 = vadd.f32 %v1216, 0.5
        %v1219 = vadd.f32 %v1217, 0.5
        %v1220 = vtanh.pop %v1198
        %v1221 = vtanh.pop %v1202
        %v1222 = vmul.f32 %v1199, 0.5
        %v1223 = vmul.f32 %v1203, 0.5
        %v1224 = vtanh.pop %v1222
        %v1225 = vtanh.pop %v1223
        %v1226 = vmul.f32 %v1224, 0.5
        %v1227 = vmul.f32 %v1225, 0.5
        %v1228 = vadd.f32 %v1226, 0.5
        %v1229 = vadd.f32 %v1227, 0.5
        %v1230 = vld [vmem:[%s398] sm:$0xff]
        %v1231 = vld [vmem:[%s398 + $0x8] sm:$0xff]
        %v1232 = vmul.f32 %v1230, %v1218
        %v1233 = vmul.f32 %v1231, %v1219
        %v1234 = vmul.f32 %v1210, %v1220
        %v1235 = vmul.f32 %v1211, %v1221
        %v1236 = vadd.f32 %v1232, %v1234
        %v1237 = vadd.f32 %v1233, %v1235
        %v1238 = vtanh.pop %v1236
        %v1239 = vtanh.pop %v1237
        %v1240 = vmul.f32 %v1228, %v1238
        %v1241 = vmul.f32 %v1229, %v1239
        %1242 = vst [vmem:[%s467] sm:$0xff] %v1240
        %1243 = vst [vmem:[%s467 + $0x8] sm:$0xff] %v1241
        %1244 = vst [vmem:[%s474] sm:$0xff] %v1236
        %1245 = vst [vmem:[%s474 + $0x8] sm:$0xff] %v1237
        %s1246 = sand.u32 %s211, 1
        %s1247 = scalar_lea.sflag [#allocation5], %s1246
        %s1248 = sand.u32 %s211, 1
        %s1249 = smul.addr %s1248, 16
        %s1250 = scalar_lea.vmem [#allocation8], %s1249
        %s1251 = sand.u32 %s239, 1
        %s1252 = scalar_lea.sflag [#allocation10], %s1251
        %s1253 = sand.u32 %s239, 1
        %s1254 = smul.addr %s1253, 16
        %s1255 = scalar_lea.vmem [#allocation9], %s1254
        // Predicated region
        $region91: #{lstm_cell.1} parent=77 // pred_check
          %p1256 = pneg %p221
        $region92: #{lstm_cell.1} parent=77 // pred_check_branch
          %1258 = sbr.rel (%p1256) target = $region94
        $region93: #{lstm_cell.1} parent=77 // pred_region
          %s1259 = smul.u32 2, %s36
          %s1261 = ssub.s32 256, 256
          %1262 = vsyncadd %s1247, %s1261
          %s1263 = smul.addr %s1259, 2
          %s1264 = sadd.s32 %s35, %s1263
          %s1265 = smul.addr %s1264, 128
          %s1266 = scalar_lea.hbm %s6, %s1265
          %s1267 = sshll.u32 %s1250, 4
          %s1268 = int_to_ptr.vmem [resolvable:$true] %s1267
          %1273 = dma.vmem_to_hbm [thread:$0]  %s1268, 256, %s1266, %s1247, 128, 256, 8
        $region94: #{lstm_cell.1} parent=77 // pred_fallthru
          _
        // Predicated region
        $region95: #{lstm_cell.1} parent=77 // pred_check
          %p1274 = pneg %p249
        $region96: #{lstm_cell.1} parent=77 // pred_check_branch
          %1276 = sbr.rel (%p1274) target = $region98
        $region97: #{lstm_cell.1} parent=77 // pred_region
          %s1277 = smul.u32 2, %s36
          %s1279 = ssub.s32 256, 256
          %1280 = vsyncadd %s1252, %s1279
          %s1281 = smul.addr %s1277, 2
          %s1282 = sadd.s32 %s35, %s1281
          %s1283 = smul.addr %s1282, 128
          %s1284 = scalar_lea.hbm %s7, %s1283
          %s1285 = sshll.u32 %s1255, 4
          %s1286 = int_to_ptr.vmem [resolvable:$true] %s1285
          %1291 = dma.vmem_to_hbm [thread:$0]  %s1286, 256, %s1284, %s1252, 128, 256, 8
        $region98: #{lstm_cell.1} parent=77 // pred_fallthru
          _
      $region78: #{lstm_cell.1} parent=5 // pred_fallthru
        _
      %p1292 = scmp.le.s32.totalorder 2, %s26
      // Predicated region
      $region99: #{lstm_cell.1} parent=5 // pred_check
        %p1293 = pneg %p1292
      $region100: #{lstm_cell.1} parent=5 // pred_check_branch
        %1295 = sbr.rel (%p1293) target = $region102
      $region101: #{lstm_cell.1} parent=5 // pred_region
        %s1296 = ssub.s32 %s26, 2
        // Predicated region
        $region103: #{lstm_cell.1} parent=101 // pred_check
          %p1297 = pneg %p227
        $region104: #{lstm_cell.1} parent=101 // pred_check_branch
          %1299 = sbr.rel (%p1297) target = $region106
        $region105: #{lstm_cell.1} parent=101 // pred_region
          %s1300 = sand.u32 %s212, 1
          %s1301 = scalar_lea.sflag [#allocation5], %s1300
          %s1302 = sand.u32 %s212, 1
          %s1303 = smul.addr %s1302, 16
          %s1304 = scalar_lea.vmem [#allocation8], %s1303
          %1305 = dma.done %s1301, 256
        $region106: #{lstm_cell.1} parent=101 // pred_fallthru
          _
        // Predicated region
        $region107: #{lstm_cell.1} parent=101 // pred_check
          %p1306 = pneg %p255
        $region108: #{lstm_cell.1} parent=101 // pred_check_branch
          %1308 = sbr.rel (%p1306) target = $region110
        $region109: #{lstm_cell.1} parent=101 // pred_region
          %s1309 = sand.u32 %s240, 1
          %s1310 = scalar_lea.sflag [#allocation10], %s1309
          %s1311 = sand.u32 %s240, 1
          %s1312 = smul.addr %s1311, 16
          %s1313 = scalar_lea.vmem [#allocation9], %s1312
          %1314 = dma.done %s1310, 256
        $region110: #{lstm_cell.1} parent=101 // pred_fallthru
          _
      $region102: #{lstm_cell.1} parent=5 // pred_fallthru
        _
    $region6: #{lstm_cell.1} parent=1 // loop_footer
      %s30 = sadd.s32 1, %s26
    $region7: #{lstm_cell.1} parent=1 // loop_footer_branch
      %25 = sbr.rel target = $region3
    $region8: #{lstm_cell.1} parent=1 // loop_exit
      _
    %1315 = vsyncpa [#allocation4], 1
    %s1316 = scalar_lea.sflag [#allocation4], 1
    %1317 = vsyncpa %s1316, 1
    %1318 = vsyncpa [#allocation7], 1
    %s1319 = scalar_lea.sflag [#allocation7], 1
    %1320 = vsyncpa %s1319, 1
    %1321 = vsyncpa [#allocation5], 1
    %s1322 = scalar_lea.sflag [#allocation5], 1
    %1323 = vsyncpa %s1322, 1
    %1324 = vsyncpa [#allocation10], 1
    %s1325 = scalar_lea.sflag [#allocation10], 1
    %1326 = vsyncpa %s1325, 1

</llo_original>
